<compile_context>
chip_gen: v5e
topology: v5e:2x2
jax: 0.10.0
libtpu: 0.0.40
codegen_flags: <defaults>
</compile_context>

<pallas_src>
import functools

import numpy as np
import jax
import jax.numpy as jnp
from jax.experimental import pallas as pl
from jax.experimental.pallas import tpu as pltpu


def _round_up(x, m):
    return (x + m - 1) // m * m


# ----------------------------------------------------------------------------
# Kernel 1: ConvTranspose2d(k=2, s=2) as a row-block matmul.
# Output layout (rows, di, cols, (dj, o)) makes the pixel shuffle a free reshape.
# ----------------------------------------------------------------------------
def _deconv2x2_kernel(x_ref, w_ref, b_ref, o_ref, *, cout, cdtype):
    """x_ref: (tr, W2, Cin); w_ref: (Cin, 4*Cout) cols=(di,dj,o);
    b_ref: (1, 4*Cout) f32; o_ref: (tr, 2, W2, 2*Cout)."""
    y = jax.lax.dot_general(
        x_ref[...].astype(cdtype), w_ref[...].astype(cdtype),
        dimension_numbers=(((2,), (0,)), ((), ())),
        preferred_element_type=jnp.float32)              # (tr, W2, 4*Cout) f32
    y = y + b_ref[...].reshape(1, 1, 4 * cout)
    tr, w2 = y.shape[0], y.shape[1]
    o_ref[:, 0:1, :, :] = y[:, :, :2 * cout].reshape(tr, 1, w2, 2 * cout).astype(o_ref.dtype)
    o_ref[:, 1:2, :, :] = y[:, :, 2 * cout:].reshape(tr, 1, w2, 2 * cout).astype(o_ref.dtype)


def pallas_deconv2x2(x2_nhwc, w_up, b_up, *, cdtype=jnp.bfloat16):
    """x2: (N, H2, W2, Cin); w_up: (Cin, Cout, 2, 2) PyTorch layout; b: (Cout,).

    Returns outputs2 in NHWC with dtype == cdtype (bf16 by default: halves the
    HBM bytes handed to the fused conv kernel).
    """
    N, H2, W2, Cin = x2_nhwc.shape
    Cout = w_up.shape[1]

    # (Cin, di, dj, o) -> (Cin, 4*Cout): columns ordered (di, dj, o).
    w_mat = jnp.transpose(w_up, (0, 2, 3, 1)).reshape(Cin, 4 * Cout)
    b_mat = jnp.tile(b_up, 4).reshape(1, 4 * Cout).astype(jnp.float32)

    R = N * H2
    x_rows = x2_nhwc.reshape(R, W2, Cin)                 # free reshape
    tr = max(1, min(R, 2048 // max(W2, 1)))              # ~2K matmul rows/step
    Rp = _round_up(R, tr)
    if Rp != R:
        x_rows = jnp.pad(x_rows, ((0, Rp - R), (0, 0), (0, 0)))

    kern = functools.partial(_deconv2x2_kernel, cout=Cout, cdtype=cdtype)
    y = pl.pallas_call(
        kern,
        out_shape=jax.ShapeDtypeStruct((Rp, 2, W2, 2 * Cout), cdtype),
        grid=(Rp // tr,),
        in_specs=[
            pl.BlockSpec((tr, W2, Cin), lambda i: (i, 0, 0)),
            pl.BlockSpec((Cin, 4 * Cout), lambda i: (0, 0)),   # resident weight
            pl.BlockSpec((1, 4 * Cout), lambda i: (0, 0)),     # resident bias
        ],
        out_specs=pl.BlockSpec((tr, 2, W2, 2 * Cout), lambda i: (i, 0, 0, 0)),
        compiler_params=pltpu.CompilerParams(
            dimension_semantics=("parallel",),
            vmem_limit_bytes=64 * 1024 * 1024),
    )(x_rows, w_mat, b_mat)

    # Flat order is (n, i, di, j, dj, o) == pixel-shuffle order, so NHWC is a
    # pure reshape: no transpose op, no extra HBM round trip.
    return y[:R].reshape(N, 2 * H2, 2 * W2, Cout)


# ----------------------------------------------------------------------------
# Kernel 2: fused pad + channel-concat + conv3x3+ReLU + conv3x3+ReLU
# ----------------------------------------------------------------------------
def _fused_upconv_kernel(x1_ref, o2_ref, w1_ref, b1_ref, w2_ref, b2_ref, o_ref,
                         cat_ref, hp_ref, acc_ref, *, pad_off, cdtype):
    """Per image:
      x1_ref : (1, H1, W1, Cskip)          skip connection (unpadded, f32)
      o2_ref : (1, Ho, Wo, Cup)            upsampled features (cdtype)
      w1_ref : (3, 3, Cskip+Cup, Cm)       conv1 weight (merged K, HWIO)
      w2_ref : (3, 3, Cm, Cm)              conv2 weight
      b*_ref : (1, Cm)                     biases (f32)
      o_ref  : (1, Ho, Wo, Cm)             output (f32)
      cat_ref: (1, Ho+2, Wo+2, Cskip+Cup)  cdtype scratch: padded concat
      hp_ref : (1, Ho+2, Wo+2, Cm)         cdtype scratch: padded conv1 output
      acc_ref: (1, Ho, Wo, Cm)             f32 accumulator (shared by both convs)
    """
    _, H1, W1, Cskip = x1_ref.shape
    _, Ho, Wo, Cup = o2_ref.shape
    Hp, Wp = Ho + 2, Wo + 2
    Ccat = Cskip + Cup
    Cm = o_ref.shape[3]
    p = pad_off
    t = 1 + p                       # zero-border thickness around the skip data

    # ---- zero only the thin pad borders (not whole frames).  Interiors are
    #      fully rewritten below, so this is correct for every grid step and
    #      for any megacore sharding of the batch axis. --------------------
    z_row = jnp.zeros((1, t, Wp, Ccat), cat_ref.dtype)
    z_col = jnp.zeros((1, Hp, t, Ccat), cat_ref.dtype)
    cat_ref[:, 0:t, :, :] = z_row
    cat_ref[:, Hp - t:Hp, :, :] = z_row
    cat_ref[:, :, 0:t, :] = z_col
    cat_ref[:, :, Wp - t:Wp, :] = z_col
    zh_row = jnp.zeros((1, 1, Wp, Cm), hp_ref.dtype)
    zh_col = jnp.zeros((1, Hp, 1, Cm), hp_ref.dtype)
    hp_ref[:, 0:1, :, :] = zh_row
    hp_ref[:, Hp - 1:Hp, :, :] = zh_row
    hp_ref[:, :, 0:1, :] = zh_col
    hp_ref[:, :, Wp - 1:Wp, :] = zh_col

    # ---- the "concat" is just two channel-sliced stores into one scratch ----
    cat_ref[:, t:t + H1, t:t + W1, 0:Cskip] = x1_ref[...].astype(cat_ref.dtype)
    cat_ref[:, 1:1 + Ho, 1:1 + Wo, Cskip:Ccat] = o2_ref[...].astype(cat_ref.dtype)

    def conv3x3(src_ref, w_ref, b_ref):
        """acc_ref <- bias; acc_ref += 9 taps of src * w (merged K)."""
        acc_ref[...] = jnp.broadcast_to(
            b_ref[...].astype(jnp.float32).reshape(1, 1, 1, Cm), acc_ref.shape)
        for dy in range(3):
            for dx in range(3):
                # TODO(synk): dx taps slice the sublane (W) axis; if profiling
                # shows relayout copies, switch to pltpu.roll-based taps.
                acc_ref[...] += jax.lax.dot_general(
                    src_ref[:, dy:dy + Ho, dx:dx + Wo, :],
                    w_ref[dy, dx].astype(cdtype),
                    dimension_numbers=(((3,), (0,)), ((), ())),
                    preferred_element_type=jnp.float32)

    # conv1 + bias + ReLU  (concat never hits HBM; h stays in VMEM only)
    conv3x3(cat_ref, w1_ref, b1_ref)
    hp_ref[:, 1:1 + Ho, 1:1 + Wo, :] = \
        jnp.maximum(acc_ref[...], 0.0).astype(hp_ref.dtype)

    # conv2 + bias + ReLU directly from the VMEM-resident h
    conv3x3(hp_ref, w2_ref, b2_ref)
    o_ref[...] = jnp.maximum(acc_ref[...], 0.0).astype(o_ref.dtype)


def pallas_fused_up_conv(x1, o2, w1, b1, w2, b2, *, pad_off, cdtype):
    N, H1, W1, Cskip = x1.shape
    _, Ho, Wo, Cup = o2.shape
    Ccat = Cskip + Cup
    Cm = w1.shape[3]
    b1_2d = b1.reshape(1, Cm).astype(jnp.float32)
    b2_2d = b2.reshape(1, Cm).astype(jnp.float32)

    kern = functools.partial(_fused_upconv_kernel, pad_off=pad_off, cdtype=cdtype)
    # TODO(synk): add an H row-strip grid axis (2-row halo) for large frames /
    # v7x's 64 MiB VMEM; at demo shapes full frames per step fit comfortably.
    return pl.pallas_call(
        kern,
        out_shape=jax.ShapeDtypeStruct((N, Ho, Wo, Cm), jnp.float32),
        grid=(N,),
        in_specs=[
            pl.BlockSpec((1, H1, W1, Cskip), lambda n: (n, 0, 0, 0)),
            pl.BlockSpec((1, Ho, Wo, Cup), lambda n: (n, 0, 0, 0)),
            pl.BlockSpec((3, 3, Ccat, Cm), lambda n: (0, 0, 0, 0)),
            pl.BlockSpec((1, Cm), lambda n: (0, 0)),
            pl.BlockSpec((3, 3, Cm, Cm), lambda n: (0, 0, 0, 0)),
            pl.BlockSpec((1, Cm), lambda n: (0, 0)),
        ],
        out_specs=pl.BlockSpec((1, Ho, Wo, Cm), lambda n: (n, 0, 0, 0)),
        scratch_shapes=[
            pltpu.VMEM((1, Ho + 2, Wo + 2, Ccat), cdtype),   # padded concat
            pltpu.VMEM((1, Ho + 2, Wo + 2, Cm), cdtype),     # padded conv1 out
            pltpu.VMEM((1, Ho, Wo, Cm), jnp.float32),        # f32 accumulator
        ],
        compiler_params=pltpu.CompilerParams(
            dimension_semantics=("parallel",),
            vmem_limit_bytes=64 * 1024 * 1024),
    )(x1, o2, w1, b1_2d, w2, b2_2d)


# ----------------------------------------------------------------------------
# Full forward
# ----------------------------------------------------------------------------
def unet_up_forward(inputs1_nchw, inputs2_nchw, params, *,
                    compute_dtype=jnp.bfloat16):
    """Forward of unetUp(in_size, out_size, is_deconv=True). Returns NCHW f32.

    compute_dtype: dtype fed to the MXU and used for the o2 intermediate and
    the cat/h scratches (accumulation is always f32). bf16 is the default
    (MXU-native on v5e/v6e/v7x); pass jnp.float32 for a strict check.
    """
    # NCHW -> NHWC
    x1 = jnp.transpose(inputs1_nchw, (0, 2, 3, 1)).astype(jnp.float32)
    x2 = jnp.transpose(inputs2_nchw, (0, 2, 3, 1)).astype(jnp.float32)

    # --- up: ConvTranspose2d(in_size, out_size, 2, 2) ------------------------
    o2 = pallas_deconv2x2(x2, params["up_w"], params["up_b"], cdtype=compute_dtype)

    # --- fused pad + concat + conv1 + ReLU + conv2 + ReLU ---------------------
    Ho, Wo = o2.shape[1], o2.shape[2]
    H1, W1 = x1.shape[1], x1.shape[2]
    off = Ho - H1
    assert off >= 0 and off % 2 == 0, \
        "F.pad offset must be even and non-negative (torch.cat would fail otherwise)"
    p = off // 2
    assert Wo == W1 + 2 * p, "width/height padding mismatch vs. PyTorch F.pad"
    Cskip = x1.shape[3]
    assert params["c1_w"].shape[2] == Cskip + o2.shape[3]

    out = pallas_fused_up_conv(x1, o2, params["c1_w"], params["c1_b"],
                               params["c2_w"], params["c2_b"],
                               pad_off=p, cdtype=compute_dtype)

    # NHWC -> NCHW
    return jnp.transpose(out, (0, 3, 1, 2))


# ----------------------------------------------------------------------------
# Numpy reference (mirrors PyTorch semantics, NCHW)
# ----------------------------------------------------------------------------
def ref_convtranspose2x2(x, w, b):
    N, C, H, W = x.shape
    Cout = w.shape[1]
    y = np.zeros((N, Cout, 2 * H, 2 * W), np.float32)
    for di in range(2):
        for dj in range(2):
            y[:, :, di::2, dj::2] = np.einsum("nchw,co->nohw", x, w[:, :, di, dj])
    return y + b[None, :, None, None]


def ref_conv3x3_relu(x, w_hwio, b):
    N, C, H, W = x.shape
    xp = np.pad(x, ((0, 0), (0, 0), (1, 1), (1, 1)))
    Cout = w_hwio.shape[3]
    y = np.zeros((N, Cout, H, W), np.float32)
    for dy in range(3):
        for dx in range(3):
            y += np.einsum("nchw,co->nohw", xp[:, :, dy:dy + H, dx:dx + W],
                           w_hwio[dy, dx])
    y += b[None, :, None, None]
    return np.maximum(y, 0.0)


def ref_unet_up(x1, x2, params):
    o2 = ref_convtranspose2x2(np.asarray(x2), np.asarray(params["up_w"]),
                              np.asarray(params["up_b"]))
    off = o2.shape[2] - x1.shape[2]
    p = off // 2
    o1 = np.pad(np.asarray(x1), ((0, 0), (0, 0), (p, p), (p, p)))
    cat = np.concatenate([o1, o2], axis=1)
    h = ref_conv3x3_relu(cat, np.asarray(params["c1_w"]), np.asarray(params["c1_b"]))
    return ref_conv3x3_relu(h, np.asarray(params["c2_w"]), np.asarray(params["c2_b"]))


# ----------------------------------------------------------------------------
if __name__ == "__main__":
    # Small shapes: unetUp(in_size=8, out_size=4, is_deconv=True)
    #   inputs1 (skip): (2, 4, 16, 16)   inputs2 (coarse): (2, 8, 8, 8)
    in_size, out_size = 8, 4
    key = jax.random.PRNGKey(0)
    k1, k2, k3, k4, k5, k6, k7, k8 = jax.random.split(key, 8)

    inputs1 = jax.random.normal(k1, (2, out_size, 16, 16), jnp.float32)
    inputs2 = jax.random.normal(k2, (2, in_size, 8, 8), jnp.float32)

    params = {
        # ConvTranspose2d(in_size, out_size, 2, 2): weight (Cin, Cout, 2, 2)
        "up_w": 0.1 * jax.random.normal(k3, (in_size, out_size, 2, 2), jnp.float32),
        "up_b": 0.1 * jax.random.normal(k4, (out_size,), jnp.float32),
        # Conv2d(in_size, out_size, 3, 1, 1): stored HWIO (3, 3, Cin, Cout)
        "c1_w": 0.1 * jax.random.normal(k5, (3, 3, in_size, out_size), jnp.float32),
        "c1_b": 0.1 * jax.random.normal(k6, (out_size,), jnp.float32),
        # Conv2d(out_size, out_size, 3, 1, 1)
        "c2_w": 0.1 * jax.random.normal(k7, (3, 3, out_size, out_size), jnp.float32),
        "c2_b": 0.1 * jax.random.normal(k8, (out_size,), jnp.float32),
    }

    ref = ref_unet_up(np.asarray(inputs1), np.asarray(inputs2), params)

    # f32 MXU path: strict correctness check.
    out_f32 = unet_up_forward(inputs1, inputs2, params, compute_dtype=jnp.float32)
    out_f32 = jax.block_until_ready(out_f32)
    assert out_f32.shape == ref.shape, (out_f32.shape, ref.shape)
    np.testing.assert_allclose(np.asarray(out_f32), ref, rtol=1e-2, atol=1e-2)

    # bf16 MXU inputs / f32 accumulation (default, recommended on v5e/v6e/v7x).
    # o2 and the conv1 intermediate are stored in bf16 — intentional extra
    # rounding vs. PyTorch, covered by the looser tolerance.
    out_bf16 = unet_up_forward(inputs1, inputs2, params)   # default = bfloat16
    out_bf16 = jax.block_until_ready(out_bf16)
    np.testing.assert_allclose(np.asarray(out_bf16), ref, rtol=7.5e-2, atol=7.5e-2)

    print("KERNEL_OK")
</pallas_src>

<mosaic_0001>
module attributes {stable_mosaic.version = 11 : i64} {
  func.func @_deconv2x2_kernel(%arg0: i32, %arg1: memref<16x8x8xf32, #tpu.memory_space<vmem>>, %arg2: memref<8x16xf32, #tpu.memory_space<vmem>>, %arg3: memref<1x16xf32, #tpu.memory_space<vmem>>, %arg4: memref<16x2x8x8xf32, #tpu.memory_space<vmem>>) attributes {dimension_semantics = [#tpu.dimension_semantics<parallel>], iteration_bounds = array<i64: 1>, scalar_prefetch = 0 : i64, scratch_operands = 0 : i64, tpu.core_type = #tpu.core_type<tc>, window_params = [{transform_indices = @transform_0, window_bounds = array<i64: 16, 8, 8>}, {pipeline_mode = #tpu.pipeline_mode<synchronous>, transform_indices = @transform_1, window_bounds = array<i64: 8, 16>}, {pipeline_mode = #tpu.pipeline_mode<synchronous>, transform_indices = @transform_2, window_bounds = array<i64: 1, 16>}, {transform_indices = @transform_3, window_bounds = array<i64: 16, 2, 8, 8>}]} {
    %c0 = arith.constant 0 : index
    %c0_0 = arith.constant 0 : index
    %c0_1 = arith.constant 0 : index
    %0 = vector.load %arg1[%c0, %c0_0, %c0_1] : memref<16x8x8xf32, #tpu.memory_space<vmem>>, vector<16x8x8xf32>
    %c0_2 = arith.constant 0 : index
    %c0_3 = arith.constant 0 : index
    %1 = vector.load %arg2[%c0_2, %c0_3] : memref<8x16xf32, #tpu.memory_space<vmem>>, vector<8x16xf32>
    %cst = arith.constant dense<0.000000e+00> : vector<16x8x16xf32>
    %2 = tpu.matmul %0, %1, %cst {dimension_numbers = #tpu.dot_dimension_numbers<[2], [0], [0, 1], [1], [0, 0, 0, 1, 1, 1], [], []>} : vector<16x8x8xf32>, vector<8x16xf32>, vector<16x8x16xf32> -> vector<16x8x16xf32>
    %c0_4 = arith.constant 0 : index
    %c0_5 = arith.constant 0 : index
    %3 = vector.load %arg3[%c0_4, %c0_5] : memref<1x16xf32, #tpu.memory_space<vmem>>, vector<1x16xf32>
    %4 = vector.shape_cast %3 : vector<1x16xf32> to vector<1x1x16xf32>
    %5 = vector.broadcast %4 : vector<1x1x16xf32> to vector<16x8x16xf32>
    %6 = arith.addf %2, %5 : vector<16x8x16xf32>
    %7 = vector.extract_strided_slice %6 {offsets = [0, 0, 0], sizes = [16, 8, 8], strides = [1, 1, 1]} : vector<16x8x16xf32> to vector<16x8x8xf32>
    %8 = vector.shape_cast %7 : vector<16x8x8xf32> to vector<16x1x8x8xf32>
    %c0_6 = arith.constant 0 : index
    %c0_7 = arith.constant 0 : index
    %c0_8 = arith.constant 0 : index
    %c0_9 = arith.constant 0 : index
    %9 = vector.load %arg4[%c0_6, %c0_7, %c0_8, %c0_9] : memref<16x2x8x8xf32, #tpu.memory_space<vmem>>, vector<16x1x8x8xf32>
    tpu.vector_store %arg4[%c0_6, %c0_7, %c0_8, %c0_9], %8 {strides = array<i32>} : memref<16x2x8x8xf32, #tpu.memory_space<vmem>>, vector<16x1x8x8xf32>,
    %10 = vector.extract_strided_slice %6 {offsets = [0, 0, 8], sizes = [16, 8, 8], strides = [1, 1, 1]} : vector<16x8x16xf32> to vector<16x8x8xf32>
    %11 = vector.shape_cast %10 : vector<16x8x8xf32> to vector<16x1x8x8xf32>
    %c0_10 = arith.constant 0 : index
    %c1 = arith.constant 1 : index
    %c0_11 = arith.constant 0 : index
    %c0_12 = arith.constant 0 : index
    %12 = vector.load %arg4[%c0_10, %c1, %c0_11, %c0_12] : memref<16x2x8x8xf32, #tpu.memory_space<vmem>>, vector<16x1x8x8xf32>
    tpu.vector_store %arg4[%c0_10, %c1, %c0_11, %c0_12], %11 {strides = array<i32>} : memref<16x2x8x8xf32, #tpu.memory_space<vmem>>, vector<16x1x8x8xf32>,
    return
  }
  func.func @transform_0(%arg0: i32) -> (i32, i32, i32) {
    %c0_i32 = arith.constant 0 : i32
    %c0_i32_0 = arith.constant 0 : i32
    %c0_i32_1 = arith.constant 0 : i32
    return %arg0, %c0_i32, %c0_i32_0 : i32, i32, i32
  }
  func.func @transform_1(%arg0: i32) -> (i32, i32) {
    %c0_i32 = arith.constant 0 : i32
    %c0_i32_0 = arith.constant 0 : i32
    %c0_i32_1 = arith.constant 0 : i32
    return %c0_i32, %c0_i32_0 : i32, i32
  }
  func.func @transform_2(%arg0: i32) -> (i32, i32) {
    %c0_i32 = arith.constant 0 : i32
    %c0_i32_0 = arith.constant 0 : i32
    %c0_i32_1 = arith.constant 0 : i32
    return %c0_i32, %c0_i32_0 : i32, i32
  }
  func.func @transform_3(%arg0: i32) -> (i32, i32, i32, i32) {
    %c0_i32 = arith.constant 0 : i32
    %c0_i32_0 = arith.constant 0 : i32
    %c0_i32_1 = arith.constant 0 : i32
    %c0_i32_2 = arith.constant 0 : i32
    return %arg0, %c0_i32, %c0_i32_0, %c0_i32_1 : i32, i32, i32, i32
  }
}

</mosaic_0001>

<llo_original>
// kernel: tpu_custom_call.1
$region0: #{tpu_custom_call.1}
  #allocation0 [shape = 'u32[]', space=smem, size = 0x4, offset = 0x4, fixed_abs, tag = 'smem constant byte address 0x4 - core index']
  #allocation1 [shape = 'u32[72,128]{1,0:T(1,128)}', space=vmem, size = 0x9000, scoped, tag = 'internal scratch']
  %s0 = inlined_call_operand.vmem [shape: f32[16,8,8], index: 0, kind: input, shape index: {}]
  %s1 = inlined_call_operand.vmem [shape: f32[8,16], index: 1, kind: input, shape index: {}]
  %s2 = inlined_call_operand.vmem [shape: f32[1,16], index: 2, kind: input, shape index: {}]
  %s3 = inlined_call_operand.vmem [shape: f32[16,2,8,8], index: 3, kind: output, shape index: {}]
  %s4 = sld [smem:[#allocation0]]
  $region22: #{tpu_custom_call.1} parent=0
    _
  %s6 = ssub.s32 1, %s4
  %s7 = scalar_select 0, %s6, %s4
  // Predicated region
  $region2: #{tpu_custom_call.1} parent=0 // pred_check
    _
  $region3: #{tpu_custom_call.1} parent=0 // pred_check_branch
    %9 = sbr.rel (0) target = $region5
  $region4: #{tpu_custom_call.1} parent=0 // pred_region
    _
  $region5: #{tpu_custom_call.1} parent=0 // pred_fallthru
    _
  // Predicated region
  $region6: #{tpu_custom_call.1} parent=0 // pred_check
    _
  $region7: #{tpu_custom_call.1} parent=0 // pred_check_branch
    %11 = sbr.rel (0) target = $region9
  $region8: #{tpu_custom_call.1} parent=0 // pred_region
    _
  $region9: #{tpu_custom_call.1} parent=0 // pred_fallthru
    _
  // Predicated region
  $region10: #{tpu_custom_call.1} parent=0 // pred_check
    _
  $region11: #{tpu_custom_call.1} parent=0 // pred_check_branch
    %13 = sbr.rel (0) target = $region13
  $region12: #{tpu_custom_call.1} parent=0 // pred_region
    _
  $region13: #{tpu_custom_call.1} parent=0 // pred_fallthru
    _
  %v14 = vld [vmem:[%s0] sm:$0xff]
  %v15 = vld [vmem:[%s0 + $0x8] sm:$0xff]
  %v16 = vld [vmem:[%s0 + $0x10] sm:$0xff]
  %v17 = vld [vmem:[%s0 + $0x18] sm:$0xff]
  %v18 = vld [vmem:[%s0 + $0x20] sm:$0xff]
  %v19 = vld [vmem:[%s0 + $0x28] sm:$0xff]
  %v20 = vld [vmem:[%s0 + $0x30] sm:$0xff]
  %v21 = vld [vmem:[%s0 + $0x38] sm:$0xff]
  %v22 = vld [vmem:[%s0 + $0x40] sm:$0xff]
  %v23 = vld [vmem:[%s0 + $0x48] sm:$0xff]
  %v24 = vld [vmem:[%s0 + $0x50] sm:$0xff]
  %v25 = vld [vmem:[%s0 + $0x58] sm:$0xff]
  %v26 = vld [vmem:[%s0 + $0x60] sm:$0xff]
  %v27 = vld [vmem:[%s0 + $0x68] sm:$0xff]
  %v28 = vld [vmem:[%s0 + $0x70] sm:$0xff]
  %v29 = vld [vmem:[%s0 + $0x78] sm:$0xff]
  %v30 = vld [vmem:[%s1] sm:$0xff]
  %v31 = vld [vmem:[%s2] sm:$0x1]
  %v33 = vperm.slane %v31, 0
  %vm35 = vcmask 64512
  %v37 = vsel %vm35, %v14, 0
  %v40 = vsel %vm35, %v15, 0
  %v43 = vsel %vm35, %v16, 0
  %v46 = vsel %vm35, %v17, 0
  %v49 = vsel %vm35, %v18, 0
  %v52 = vsel %vm35, %v19, 0
  %v55 = vsel %vm35, %v20, 0
  %v58 = vsel %vm35, %v21, 0
  %v61 = vsel %vm35, %v22, 0
  %v64 = vsel %vm35, %v23, 0
  %v67 = vsel %vm35, %v24, 0
  %v70 = vsel %vm35, %v25, 0
  %v73 = vsel %vm35, %v26, 0
  %v76 = vsel %vm35, %v27, 0
  %v79 = vsel %vm35, %v28, 0
  %v82 = vsel %vm35, %v29, 0
  %84 = vmatpush.msra.mxu0 0.0
  %85 = vmatpush.msra.mxu0 0.0
  %86 = vmatpush.msra.mxu0 0.0
  %87 = vmatpush.msra.mxu0 0.0
  %88 = vmatpush.msra.mxu0 0.0
  %89 = vmatpush.msra.mxu0 0.0
  %90 = vmatpush.msra.mxu0 0.0
  %91 = vmatpush.msra.mxu0 0.0
  %92 = vmatpush.msra.mxu0 0.0
  %93 = vmatpush.msra.mxu0 0.0
  %94 = vmatpush.msra.mxu0 0.0
  %95 = vmatpush.msra.mxu0 0.0
  %96 = vmatpush.msra.mxu0 0.0
  %97 = vmatpush.msra.mxu0 0.0
  %98 = vmatpush.msra.mxu0 0.0
  %99 = vmatpush.msra.mxu0 %v30
  %100 = vmatmul.f32.gmra.mxu0 %v37
  %v101 = vpop.f32.mrf.mxu0
  %v102 = vadd.f32 %v33, %v101
  %103 = vmatmul.f32.gmra.mxu0 %v40
  %v104 = vpop.f32.mrf.mxu0
  %v105 = vadd.f32 %v33, %v104
  %106 = vmatmul.f32.gmra.mxu0 %v43
  %v107 = vpop.f32.mrf.mxu0
  %v108 = vadd.f32 %v33, %v107
  %109 = vmatmul.f32.gmra.mxu0 %v46
  %v110 = vpop.f32.mrf.mxu0
  %v111 = vadd.f32 %v33, %v110
  %112 = vmatmul.f32.gmra.mxu0 %v49
  %v113 = vpop.f32.mrf.mxu0
  %v114 = vadd.f32 %v33, %v113
  %115 = vmatmul.f32.gmra.mxu0 %v52
  %v116 = vpop.f32.mrf.mxu0
  %v117 = vadd.f32 %v33, %v116
  %118 = vmatmul.f32.gmra.mxu0 %v55
  %v119 = vpop.f32.mrf.mxu0
  %v120 = vadd.f32 %v33, %v119
  %121 = vmatmul.f32.gmra.mxu0 %v58
  %v122 = vpop.f32.mrf.mxu0
  %v123 = vadd.f32 %v33, %v122
  %124 = vmatmul.f32.gmra.mxu0 %v61
  %v125 = vpop.f32.mrf.mxu0
  %v126 = vadd.f32 %v33, %v125
  %127 = vmatmul.f32.gmra.mxu0 %v64
  %v128 = vpop.f32.mrf.mxu0
  %v129 = vadd.f32 %v33, %v128
  %130 = vmatmul.f32.gmra.mxu0 %v67
  %v131 = vpop.f32.mrf.mxu0
  %v132 = vadd.f32 %v33, %v131
  %133 = vmatmul.f32.gmra.mxu0 %v70
  %v134 = vpop.f32.mrf.mxu0
  %v135 = vadd.f32 %v33, %v134
  %136 = vmatmul.f32.gmra.mxu0 %v73
  %v137 = vpop.f32.mrf.mxu0
  %v138 = vadd.f32 %v33, %v137
  %139 = vmatmul.f32.gmra.mxu0 %v76
  %v140 = vpop.f32.mrf.mxu0
  %v141 = vadd.f32 %v33, %v140
  %142 = vmatmul.f32.gmra.mxu0 %v79
  %v143 = vpop.f32.mrf.mxu0
  %v144 = vadd.f32 %v33, %v143
  %145 = vmatmul.f32.gmra.mxu0 %v82
  %v146 = vpop.f32.mrf.mxu0
  %v147 = vadd.f32 %v33, %v146
  %148 = vdwg.mxu0
  %149 = vst.msk [vmem:[%s3] sm:$0xff] %vm35, %v102
  %150 = vst.msk [vmem:[%s3 + $0x10] sm:$0xff] %vm35, %v105
  %151 = vst.msk [vmem:[%s3 + $0x20] sm:$0xff] %vm35, %v108
  %152 = vst.msk [vmem:[%s3 + $0x30] sm:$0xff] %vm35, %v111
  %153 = vst.msk [vmem:[%s3 + $0x40] sm:$0xff] %vm35, %v114
  %154 = vst.msk [vmem:[%s3 + $0x50] sm:$0xff] %vm35, %v117
  %155 = vst.msk [vmem:[%s3 + $0x60] sm:$0xff] %vm35, %v120
  %156 = vst.msk [vmem:[%s3 + $0x70] sm:$0xff] %vm35, %v123
  %157 = vst.msk [vmem:[%s3 + $0x80] sm:$0xff] %vm35, %v126
  %158 = vst.msk [vmem:[%s3 + $0x90] sm:$0xff] %vm35, %v129
  %159 = vst.msk [vmem:[%s3 + $0xa0] sm:$0xff] %vm35, %v132
  %160 = vst.msk [vmem:[%s3 + $0xb0] sm:$0xff] %vm35, %v135
  %161 = vst.msk [vmem:[%s3 + $0xc0] sm:$0xff] %vm35, %v138
  %162 = vst.msk [vmem:[%s3 + $0xd0] sm:$0xff] %vm35, %v141
  %163 = vst.msk [vmem:[%s3 + $0xe0] sm:$0xff] %vm35, %v144
  %164 = vst.msk [vmem:[%s3 + $0xf0] sm:$0xff] %vm35, %v147
  %181 = vrot.lane.b32.xlu0 %v102, 120
  %v182 = vpop.permute.xlu0 %181
  %183 = vrot.lane.b32.xlu0 %v105, 120
  %v184 = vpop.permute.xlu0 %183
  %185 = vrot.lane.b32.xlu0 %v108, 120
  %v186 = vpop.permute.xlu0 %185
  %187 = vrot.lane.b32.xlu0 %v111, 120
  %v188 = vpop.permute.xlu0 %187
  %189 = vrot.lane.b32.xlu0 %v114, 120
  %v190 = vpop.permute.xlu0 %189
  %191 = vrot.lane.b32.xlu0 %v117, 120
  %v192 = vpop.permute.xlu0 %191
  %193 = vrot.lane.b32.xlu0 %v120, 120
  %v194 = vpop.permute.xlu0 %193
  %195 = vrot.lane.b32.xlu0 %v123, 120
  %v196 = vpop.permute.xlu0 %195
  %197 = vrot.lane.b32.xlu0 %v126, 120
  %v198 = vpop.permute.xlu0 %197
  %199 = vrot.lane.b32.xlu0 %v129, 120
  %v200 = vpop.permute.xlu0 %199
  %201 = vrot.lane.b32.xlu0 %v132, 120
  %v202 = vpop.permute.xlu0 %201
  %203 = vrot.lane.b32.xlu0 %v135, 120
  %v204 = vpop.permute.xlu0 %203
  %205 = vrot.lane.b32.xlu0 %v138, 120
  %v206 = vpop.permute.xlu0 %205
  %207 = vrot.lane.b32.xlu0 %v141, 120
  %v208 = vpop.permute.xlu0 %207
  %209 = vrot.lane.b32.xlu0 %v144, 120
  %v210 = vpop.permute.xlu0 %209
  %211 = vrot.lane.b32.xlu0 %v147, 120
  %v212 = vpop.permute.xlu0 %211
  %s229 = scalar_lea.vmem %s3, 8
  %230 = vst.msk [vmem:[%s229] sm:$0xff] %vm35, %v182
  %231 = vst.msk [vmem:[%s229 + $0x10] sm:$0xff] %vm35, %v184
  %232 = vst.msk [vmem:[%s229 + $0x20] sm:$0xff] %vm35, %v186
  %233 = vst.msk [vmem:[%s229 + $0x30] sm:$0xff] %vm35, %v188
  %234 = vst.msk [vmem:[%s229 + $0x40] sm:$0xff] %vm35, %v190
  %235 = vst.msk [vmem:[%s229 + $0x50] sm:$0xff] %vm35, %v192
  %236 = vst.msk [vmem:[%s229 + $0x60] sm:$0xff] %vm35, %v194
  %237 = vst.msk [vmem:[%s229 + $0x70] sm:$0xff] %vm35, %v196
  %238 = vst.msk [vmem:[%s229 + $0x80] sm:$0xff] %vm35, %v198
  %239 = vst.msk [vmem:[%s229 + $0x90] sm:$0xff] %vm35, %v200
  %240 = vst.msk [vmem:[%s229 + $0xa0] sm:$0xff] %vm35, %v202
  %241 = vst.msk [vmem:[%s229 + $0xb0] sm:$0xff] %vm35, %v204
  %242 = vst.msk [vmem:[%s229 + $0xc0] sm:$0xff] %vm35, %v206
  %243 = vst.msk [vmem:[%s229 + $0xd0] sm:$0xff] %vm35, %v208
  %244 = vst.msk [vmem:[%s229 + $0xe0] sm:$0xff] %vm35, %v210
  %245 = vst.msk [vmem:[%s229 + $0xf0] sm:$0xff] %vm35, %v212
  // Predicated region
  $region14: #{tpu_custom_call.1} parent=0 // pred_check
    _
  $region15: #{tpu_custom_call.1} parent=0 // pred_check_branch
    %247 = sbr.rel (0) target = $region17
  $region16: #{tpu_custom_call.1} parent=0 // pred_region
    _
  $region17: #{tpu_custom_call.1} parent=0 // pred_fallthru
    _
  // Predicated region
  $region18: #{tpu_custom_call.1} parent=0 // pred_check
    _
  $region19: #{tpu_custom_call.1} parent=0 // pred_check_branch
    %249 = sbr.rel (0) target = $region21
  $region20: #{tpu_custom_call.1} parent=0 // pred_region
    _
  $region21: #{tpu_custom_call.1} parent=0 // pred_fallthru
    _

</llo_original>
